<compile_context>
chip_gen: v5e
topology: v5e:2x2
jax: 0.10.0
libtpu: 0.0.40
codegen_flags: <defaults>
</compile_context>

<pallas_src>
import jax
import jax.numpy as jnp
from jax.experimental import pallas as pl
from jax.experimental.pallas import tpu as pltpu


def _wsum_max_kernel(feats_ref, counts_ref, w_ref, b_ref, sum_ref, max_ref):
    # feats_ref:  (TB, TN, F)            counts_ref: (TB, 1, 1) int32
    # w_ref:      (1, F) f32             b_ref:      (1, 1) f32 in SMEM
    # sum_ref:    (TB, F) f32 (resident accumulator across the node axis)
    # max_ref:    (TB, F) f32 (resident accumulator across the node axis)
    nk = pl.program_id(1)
    tb, tn, f = feats_ref.shape

    @pl.when(nk == 0)
    def _():
        sum_ref[...] = jnp.zeros_like(sum_ref)
        max_ref[...] = jnp.full(max_ref.shape, -1e30, dtype=max_ref.dtype)

    x = feats_ref[...].astype(jnp.float32)                    # (TB, TN, F)
    counts = counts_ref[...]                                   # (TB, 1, 1) int32
    w = w_ref[...].astype(jnp.float32)                         # (1, F)
    bias = b_ref[0, 0]                                         # scalar (SMEM read)

    # Validity mask from per-graph node counts, kept in (TB, TN, 1) layout
    # (no HBM mask traffic, no lane<->sublane relayout).
    node_idx = jax.lax.broadcasted_iota(jnp.int32, (tb, tn, 1), 1) + nk * tn
    mask = node_idx < counts                                   # (TB, TN, 1) bool

    # Per-node logits on VPU + lane reduce with keepdims (stays in same layout family).
    logits = jnp.sum(x * w[None, :, :], axis=-1, keepdims=True) + bias  # (TB, TN, 1)
    aw = jax.nn.sigmoid(logits) * mask.astype(jnp.float32)              # (TB, TN, 1)

    # Weighted-sum and masked-max partial reductions over this node tile.
    sum_ref[...] += jnp.sum(x * aw, axis=1)                              # (TB, F)
    max_ref[...] = jnp.maximum(
        max_ref[...],
        jnp.max(jnp.where(mask, x, jnp.float32(-1e30)), axis=1))         # (TB, F)


def _round_up(x, m):
    return (x + m - 1) // m * m


def _round_down_mult(x, m):
    return max(m, (x // m) * m)


def _choose_tiles(B, N, F, dtype):
    """Pick (tb graphs/step, tn nodes/step, vmem_limit_bytes), generation-aware."""
    itemsize = jnp.dtype(dtype).itemsize
    sublane = {4: 8, 2: 16, 1: 32}.get(itemsize, 8)
    lane = 128

    # Generation-aware VMEM budget (v7x: 64 MiB physical; v5e/v6e: 128 MiB).
    try:
        phys = pltpu.get_tpu_info().vmem_capacity_bytes
    except Exception:
        phys = 128 << 20
    if phys <= (64 << 20):          # v7x-class
        vmem_limit = 40 << 20
        block_target = 4 << 20
    else:                           # v5e / v6e
        vmem_limit = 64 << 20
        block_target = 8 << 20
    # ~2x feats block (double buffer) + ~1x block of temporaries + outputs.
    block_target = min(block_target, vmem_limit // 6)

    # VMEM footprint of one graph's tile, including lane/sublane padding.
    f_pad = _round_up(F, lane)
    n_pad_full = _round_up(N, sublane)
    per_graph = n_pad_full * f_pad * itemsize

    b_up = _round_up(B, 8)

    tb_fit = block_target // max(per_graph, 1)
    if tb_fit >= 8:
        # Whole node axis fits in one block: tile over graphs only.
        tn = N
        tb = min(_round_down_mult(tb_fit, 8), 1024, b_up)
    else:
        # Very large graphs: tile the node axis too (accumulated in the kernel).
        tb = 8
        tn_fit = block_target // max(tb * f_pad * itemsize, 1)
        tn = _round_down_mult(tn_fit, sublane)

    # Give the "parallel" graph axis >= 2 steps when possible (v7x has 2 TCs),
    # rebalancing so batch padding stays small.
    n_steps = max(pl.cdiv(B, tb), 2 if B > 8 else 1)
    tb = min(tb, _round_up(pl.cdiv(B, n_steps), 8))
    return tb, tn, vmem_limit


def weighted_sum_and_max(feats, num_nodes, w, b):
    """feats: [B, N, F] f32/bf16, num_nodes: [B] int, w: [F, 1], b: [1, 1] -> [B, 2F]."""
    B, N, F = feats.shape
    in_dtype = feats.dtype
    tb, tn, vmem_limit = _choose_tiles(B, N, F, in_dtype)

    B_pad = pl.cdiv(B, tb) * tb
    N_pad = pl.cdiv(N, tn) * tn

    if B_pad != B or N_pad != N:
        feats = jnp.pad(feats, ((0, B_pad - B), (0, N_pad - N), (0, 0)))
    if B_pad != B:
        num_nodes = jnp.pad(num_nodes, ((0, B_pad - B),))

    counts = num_nodes.astype(jnp.int32).reshape(B_pad, 1, 1)     # (B_pad, 1, 1)
    w_row = w.astype(jnp.float32).reshape(1, F)                   # lane-dense weight row
    b_smem = b.astype(jnp.float32).reshape(1, 1)                  # scalar in SMEM

    grid = (B_pad // tb, N_pad // tn)

    h_sum, h_max = pl.pallas_call(
        _wsum_max_kernel,
        out_shape=(jax.ShapeDtypeStruct((B_pad, F), jnp.float32),
                   jax.ShapeDtypeStruct((B_pad, F), jnp.float32)),
        grid_spec=pltpu.PrefetchScalarGridSpec(
            num_scalar_prefetch=0,
            grid=grid,
            in_specs=[
                pl.BlockSpec((tb, tn, F), lambda g, k: (g, k, 0)),
                pl.BlockSpec((tb, 1, 1), lambda g, k: (g, 0, 0)),
                pl.BlockSpec((1, F), lambda g, k: (0, 0)),            # stays resident
                pl.BlockSpec(memory_space=pltpu.MemorySpace.SMEM),    # bias scalar
            ],
            out_specs=[
                pl.BlockSpec((tb, F), lambda g, k: (g, 0)),   # resident across node axis
                pl.BlockSpec((tb, F), lambda g, k: (g, 0)),
            ],
        ),
        compiler_params=pltpu.CompilerParams(
            # Graph axis is embarrassingly parallel (v7x shards across its 2 TCs);
            # node axis is an accumulation -> "arbitrary".
            dimension_semantics=("parallel", "arbitrary"),
            vmem_limit_bytes=vmem_limit,
        ),
    )(feats, counts, w_row, b_smem)

    out = jnp.concatenate([h_sum[:B], h_max[:B]], axis=1)            # [B, 2F]
    return out.astype(in_dtype)


def _reference(feats, num_nodes, w, b):
    B, N, F = feats.shape
    mask = (jnp.arange(N)[None, :] < num_nodes[:, None]).astype(jnp.float32)[..., None]
    x = feats.astype(jnp.float32)
    aw = jax.nn.sigmoid(x @ w + b[0, 0]) * mask                  # [B, N, 1]
    h_sum = jnp.sum(x * aw, axis=1)                              # [B, F]
    h_max = jnp.max(jnp.where(mask > 0, x, -1e30), axis=1)       # [B, F]
    return jnp.concatenate([h_sum, h_max], axis=1)


if __name__ == "__main__":
    B, N, F = 2, 8, 32   # 2 graphs, up to 8 padded nodes each, in_feats = 32

    key = jax.random.PRNGKey(0)
    k_feats, k_w, k_b = jax.random.split(key, 3)

    feats = jax.random.normal(k_feats, (B, N, F), dtype=jnp.float32)

    # graph 0 has 5 nodes, graph 1 has 8 nodes
    num_nodes = jnp.array([5, 8], dtype=jnp.int32)
    node_idx = jnp.arange(N)[None, :]                            # [1, N]
    pad_mask = (node_idx < num_nodes[:, None]).astype(jnp.float32)[..., None]
    feats = feats * pad_mask   # padded nodes carry zeros (like a padded batched graph)

    # deterministic Linear(in_feats, 1) parameters
    w = (jax.random.normal(k_w, (F, 1), dtype=jnp.float32)
         * (1.0 / jnp.sqrt(F)))
    b = jax.random.normal(k_b, (1, 1), dtype=jnp.float32) * 0.1

    out = weighted_sum_and_max(feats, num_nodes, w, b)
    out = jax.block_until_ready(out)

    ref = _reference(feats, num_nodes, w, b)
    assert out.shape == (B, 2 * F)
    assert jnp.allclose(out, ref, atol=1e-4, rtol=1e-5)

    # TODO(synk): DGL's batched-graph object has no Pallas equivalent; it is modeled
    # as a dense padded [B, N, F] tensor plus per-graph node counts.
    print("KERNEL_OK")
</pallas_src>

<mosaic_0001>
module attributes {stable_mosaic.version = 11 : i64} {
  func.func @_wsum_max_kernel(%arg0: i32, %arg1: i32, %arg2: memref<8x8x32xf32, #tpu.memory_space<vmem>>, %arg3: memref<8x1x1xi32, #tpu.memory_space<vmem>>, %arg4: memref<1x32xf32, #tpu.memory_space<vmem>>, %arg5: memref<1x1xf32, #tpu.memory_space<smem>>, %arg6: memref<8x32xf32, #tpu.memory_space<vmem>>, %arg7: memref<8x32xf32, #tpu.memory_space<vmem>>) attributes {dimension_semantics = [#tpu.dimension_semantics<parallel>, #tpu.dimension_semantics<arbitrary>], iteration_bounds = array<i64: 1, 1>, scalar_prefetch = 0 : i64, scratch_operands = 0 : i64, tpu.core_type = #tpu.core_type<tc>, window_params = [{transform_indices = @transform_0, window_bounds = array<i64: 8, 8, 32>}, {transform_indices = @transform_1, window_bounds = array<i64: 8, 1, 1>}, {pipeline_mode = #tpu.pipeline_mode<synchronous>, transform_indices = @transform_2, window_bounds = array<i64: 1, 32>}, {transform_indices = @transform_3, window_bounds = array<i64: 1, 1>}, {transform_indices = @transform_4, window_bounds = array<i64: 8, 32>}, {transform_indices = @transform_5, window_bounds = array<i64: 8, 32>}]} {
    %c0_i32 = arith.constant 0 : i32
    %0 = arith.cmpi eq, %arg1, %c0_i32 : i32
    %1 = arith.extui %0 : i1 to i32
    %c0_i32_0 = arith.constant 0 : i32
    %2 = arith.cmpi ne, %1, %c0_i32_0 : i32
    scf.if %2 {
      %cst_22 = arith.constant 0.000000e+00 : f32
      %42 = vector.broadcast %cst_22 : f32 to vector<8x32xf32>
      %c0_23 = arith.constant 0 : index
      %c0_24 = arith.constant 0 : index
      %43 = vector.load %arg6[%c0_23, %c0_24] : memref<8x32xf32, #tpu.memory_space<vmem>>, vector<8x32xf32>
      tpu.vector_store %arg6[%c0_23, %c0_24], %42 {strides = array<i32>} : memref<8x32xf32, #tpu.memory_space<vmem>>, vector<8x32xf32>,
      %cst_25 = arith.constant -1.000000e+30 : f32
      %44 = vector.broadcast %cst_25 : f32 to vector<8x32xf32>
      %c0_26 = arith.constant 0 : index
      %c0_27 = arith.constant 0 : index
      %45 = vector.load %arg7[%c0_26, %c0_27] : memref<8x32xf32, #tpu.memory_space<vmem>>, vector<8x32xf32>
      tpu.vector_store %arg7[%c0_26, %c0_27], %44 {strides = array<i32>} : memref<8x32xf32, #tpu.memory_space<vmem>>, vector<8x32xf32>,
    } else {
    }
    %c0 = arith.constant 0 : index
    %c0_1 = arith.constant 0 : index
    %c0_2 = arith.constant 0 : index
    %3 = vector.load %arg2[%c0, %c0_1, %c0_2] : memref<8x8x32xf32, #tpu.memory_space<vmem>>, vector<8x8x32xf32>
    %c0_3 = arith.constant 0 : index
    %c0_4 = arith.constant 0 : index
    %c0_5 = arith.constant 0 : index
    %4 = vector.load %arg3[%c0_3, %c0_4, %c0_5] : memref<8x1x1xi32, #tpu.memory_space<vmem>>, vector<8x1x1xi32>
    %c0_6 = arith.constant 0 : index
    %c0_7 = arith.constant 0 : index
    %5 = vector.load %arg4[%c0_6, %c0_7] : memref<1x32xf32, #tpu.memory_space<vmem>>, vector<1x32xf32>
    %c0_8 = arith.constant 0 : index
    %c0_9 = arith.constant 0 : index
    %6 = memref.load %arg5[%c0_8, %c0_9] : memref<1x1xf32, #tpu.memory_space<smem>>
    %7 = tpu.iota {dimensions = array<i32: 1>} : vector<8x8x1xi32>
    %c8_i32 = arith.constant 8 : i32
    %8 = arith.muli %arg1, %c8_i32 : i32
    %9 = vector.broadcast %8 : i32 to vector<8x8x1xi32>
    %10 = arith.addi %7, %9 : vector<8x8x1xi32>
    %11 = vector.broadcast %4 : vector<8x1x1xi32> to vector<8x8x1xi32>
    %12 = arith.cmpi slt, %10, %11 : vector<8x8x1xi32>
    %13 = vector.shape_cast %5 : vector<1x32xf32> to vector<1x1x32xf32>
    %14 = vector.broadcast %13 : vector<1x1x32xf32> to vector<8x8x32xf32>
    %15 = arith.mulf %3, %14 : vector<8x8x32xf32>
    %cst = arith.constant dense<0.000000e+00> : vector<8x8xf32>
    %16 = vector.multi_reduction <add>, %15, %cst [2] : vector<8x8x32xf32> to vector<8x8xf32>
    %17 = vector.shape_cast %16 : vector<8x8xf32> to vector<8x8x1xf32>
    %18 = vector.broadcast %6 : f32 to vector<8x8x1xf32>
    %19 = arith.addf %17, %18 : vector<8x8x1xf32>
    %20 = arith.negf %19 : vector<8x8x1xf32>
    %21 = math.exp %20 : vector<8x8x1xf32>
    %cst_10 = arith.constant 1.000000e+00 : f32
    %22 = vector.broadcast %cst_10 : f32 to vector<8x8x1xf32>
    %23 = arith.addf %22, %21 : vector<8x8x1xf32>
    %24 = arith.divf %22, %23 : vector<8x8x1xf32>
    %25 = arith.extui %12 : vector<8x8x1xi1> to vector<8x8x1xi32>
    %26 = arith.sitofp %25 : vector<8x8x1xi32> to vector<8x8x1xf32>
    %27 = arith.mulf %24, %26 : vector<8x8x1xf32>
    %c0_11 = arith.constant 0 : index
    %c0_12 = arith.constant 0 : index
    %28 = vector.load %arg6[%c0_11, %c0_12] : memref<8x32xf32, #tpu.memory_space<vmem>>, vector<8x32xf32>
    %29 = vector.broadcast %27 : vector<8x8x1xf32> to vector<8x8x32xf32>
    %30 = arith.mulf %3, %29 : vector<8x8x32xf32>
    %cst_13 = arith.constant dense<0.000000e+00> : vector<8x32xf32>
    %31 = vector.multi_reduction <add>, %30, %cst_13 [1] : vector<8x8x32xf32> to vector<8x32xf32>
    %32 = arith.addf %28, %31 : vector<8x32xf32>
    %c0_14 = arith.constant 0 : index
    %c0_15 = arith.constant 0 : index
    %33 = vector.load %arg6[%c0_14, %c0_15] : memref<8x32xf32, #tpu.memory_space<vmem>>, vector<8x32xf32>
    tpu.vector_store %arg6[%c0_14, %c0_15], %32 {strides = array<i32>} : memref<8x32xf32, #tpu.memory_space<vmem>>, vector<8x32xf32>,
    %c0_16 = arith.constant 0 : index
    %c0_17 = arith.constant 0 : index
    %34 = vector.load %arg7[%c0_16, %c0_17] : memref<8x32xf32, #tpu.memory_space<vmem>>, vector<8x32xf32>
    %cst_18 = arith.constant -1.000000e+30 : f32
    %35 = vector.shape_cast %12 : vector<8x8x1xi1> to vector<8x8x1xi1>
    %36 = vector.broadcast %35 : vector<8x8x1xi1> to vector<8x8x32xi1>
    %37 = vector.broadcast %cst_18 : f32 to vector<8x8x32xf32>
    %38 = arith.select %36, %3, %37 : vector<8x8x32xi1>, vector<8x8x32xf32>
    %cst_19 = arith.constant dense<0xFF800000> : vector<8x32xf32>
    %39 = vector.multi_reduction <maximumf>, %38, %cst_19 [1] : vector<8x8x32xf32> to vector<8x32xf32>
    %40 = arith.maximumf %34, %39 : vector<8x32xf32>
    %c0_20 = arith.constant 0 : index
    %c0_21 = arith.constant 0 : index
    %41 = vector.load %arg7[%c0_20, %c0_21] : memref<8x32xf32, #tpu.memory_space<vmem>>, vector<8x32xf32>
    tpu.vector_store %arg7[%c0_20, %c0_21], %40 {strides = array<i32>} : memref<8x32xf32, #tpu.memory_space<vmem>>, vector<8x32xf32>,
    return
  }
  func.func @transform_0(%arg0: i32, %arg1: i32) -> (i32, i32, i32) {
    %c0_i32 = arith.constant 0 : i32
    %c0_i32_0 = arith.constant 0 : i32
    return %arg0, %arg1, %c0_i32 : i32, i32, i32
  }
  func.func @transform_1(%arg0: i32, %arg1: i32) -> (i32, i32, i32) {
    %c0_i32 = arith.constant 0 : i32
    %c0_i32_0 = arith.constant 0 : i32
    %c0_i32_1 = arith.constant 0 : i32
    return %arg0, %c0_i32, %c0_i32_0 : i32, i32, i32
  }
  func.func @transform_2(%arg0: i32, %arg1: i32) -> (i32, i32) {
    %c0_i32 = arith.constant 0 : i32
    %c0_i32_0 = arith.constant 0 : i32
    %c0_i32_1 = arith.constant 0 : i32
    return %c0_i32, %c0_i32_0 : i32, i32
  }
  func.func @transform_3(%arg0: i32, %arg1: i32) -> (i32, i32) {
    %c0_i32 = arith.constant 0 : i32
    %c0_i32_0 = arith.constant 0 : i32
    %c0_i32_1 = arith.constant 0 : i32
    return %c0_i32, %c0_i32_0 : i32, i32
  }
  func.func @transform_4(%arg0: i32, %arg1: i32) -> (i32, i32) {
    %c0_i32 = arith.constant 0 : i32
    %c0_i32_0 = arith.constant 0 : i32
    return %arg0, %c0_i32 : i32, i32
  }
  func.func @transform_5(%arg0: i32, %arg1: i32) -> (i32, i32) {
    %c0_i32 = arith.constant 0 : i32
    %c0_i32_0 = arith.constant 0 : i32
    return %arg0, %c0_i32 : i32, i32
  }
}

</mosaic_0001>

<llo_original>
// kernel: tpu_custom_call.1
$region0: #{tpu_custom_call.1}
  #allocation0 [shape = 'u32[]', space=smem, size = 0x4, offset = 0x4, fixed_abs, tag = 'smem constant byte address 0x4 - core index']
  #allocation1 [shape = 'u32[72,128]{1,0:T(1,128)}', space=vmem, size = 0x9000, scoped, tag = 'internal scratch']
  #allocation2 [shape = 'f32[1,1]{1,0:T(1,128)S(6)}', space=smem, size = 0x200, scoped, tag = 'scoped memory for tpu_custom_call.1']
  %s0 = inlined_call_operand.hbm [shape: f32[8,8,32], index: 0, kind: input, shape index: {}]
  %s1 = inlined_call_operand.vmem [shape: s32[8,1,1], index: 1, kind: input, shape index: {}]
  %s2 = inlined_call_operand.vmem [shape: f32[1,32], index: 2, kind: input, shape index: {}]
  %s3 = inlined_call_operand.<no memory space> [shape: f32[1,1], index: 3, kind: input, shape index: {}]
  %s4 = inlined_call_operand.hbm [shape: f32[8,32], index: 4, kind: output, shape index: {0}]
  %s5 = inlined_call_operand.hbm [shape: f32[8,32], index: 5, kind: output, shape index: {1}]
  %6 = xla_tuple %s4, %s5
  %s7 = sld [smem:[#allocation0]]
  $region42: #{tpu_custom_call.1} parent=0
    _
  %s9 = ssub.s32 1, %s7
  %s10 = scalar_select 0, %s9, %s7
  %11 = sst [smem:[#allocation2]] %s3
  $region1: #{tpu_custom_call.1} parent=0
    #allocation3 [shape = 'u8[32768]{0}', space=vmem, size = 0x8000, scoped, tag = 'input window, operand 0, single buffered']
    #allocation4 [shape = 's32[1]{0}', space=sflag, size = 0x4, scoped, tag = 'scoped memory for tpu_custom_call.1']
    #allocation5 [shape = 's32[1]{0}', space=sflag, size = 0x4, scoped, tag = 'scoped memory for tpu_custom_call.1']
    #allocation6 [shape = 'u8[4096]{0}', space=vmem, size = 0x1000, scoped, tag = 'output window, operand 0, single buffered']
    #allocation7 [shape = 'u8[4096]{0}', space=vmem, size = 0x1000, scoped, tag = 'output window, operand 1, single buffered']
    #allocation8 [shape = 's32[1]{0}', space=sflag, size = 0x4, scoped, tag = 'scoped memory for tpu_custom_call.1']
    %12 = vsyncpa [#allocation4], 0
    %13 = vsyncpa [#allocation5], 0
    %14 = vsyncpa [#allocation8], 0
    // Predicated region
    $region2: #{tpu_custom_call.1} parent=1 // pred_check
      _
    $region3: #{tpu_custom_call.1} parent=1 // pred_check_branch
      %16 = sbr.rel (0) target = $region5
    $region4: #{tpu_custom_call.1} parent=1 // pred_region
      %18 = vsyncadd [#allocation4], 0
      %s19 = sshll.u32 %s0, 4
      %s20 = int_to_ptr.hbm [resolvable:$true] %s19
      %s21 = sshll.u32 [#allocation3], 4
      %s22 = int_to_ptr.vmem [resolvable:$true] %s21
      %27 = dma.hbm_to_vmem [thread:$0]  %s20, 1024, %s22, [#allocation4], 128, 128, 8
    $region5: #{tpu_custom_call.1} parent=1 // pred_fallthru
      _
    // Predicated region
    $region6: #{tpu_custom_call.1} parent=1 // pred_check
      _
    $region7: #{tpu_custom_call.1} parent=1 // pred_check_branch
      %29 = sbr.rel (0) target = $region9
    $region8: #{tpu_custom_call.1} parent=1 // pred_region
      _
    $region9: #{tpu_custom_call.1} parent=1 // pred_fallthru
      _
    // Predicated region
    $region10: #{tpu_custom_call.1} parent=1 // pred_check
      _
    $region11: #{tpu_custom_call.1} parent=1 // pred_check_branch
      %31 = sbr.rel (0) target = $region13
    $region12: #{tpu_custom_call.1} parent=1 // pred_region
      _
    $region13: #{tpu_custom_call.1} parent=1 // pred_fallthru
      _
    // Predicated region
    $region14: #{tpu_custom_call.1} parent=1 // pred_check
      _
    $region15: #{tpu_custom_call.1} parent=1 // pred_check_branch
      %33 = sbr.rel (0) target = $region17
    $region16: #{tpu_custom_call.1} parent=1 // pred_region
      _
    $region17: #{tpu_custom_call.1} parent=1 // pred_fallthru
      _
    // Predicated region
    $region18: #{tpu_custom_call.1} parent=1 // pred_check
      _
    $region19: #{tpu_custom_call.1} parent=1 // pred_check_branch
      %35 = sbr.rel (0) target = $region21
    $region20: #{tpu_custom_call.1} parent=1 // pred_region
      %37 = dma.done [#allocation4], 1024
    $region21: #{tpu_custom_call.1} parent=1 // pred_fallthru
      _
    %p38 = scmp.eq.s32.totalorder 0, 0
    // Predicated region
    $region22: #{tpu_custom_call.1} parent=1 // pred_check
      %p39 = pneg %p38
    $region23: #{tpu_custom_call.1} parent=1 // pred_check_branch
      %41 = sbr.rel (%p39) target = $region25
    $region24: #{tpu_custom_call.1} parent=1 // pred_region
      %vm42 = vcmask 261120
      %43 = vst.msk [vmem:[#allocation6] sm:$0xff] %vm42, 0.0
      %44 = vst.msk [vmem:[#allocation7] sm:$0xff] %vm42, -1e+30
    $region25: #{tpu_custom_call.1} parent=1 // pred_fallthru
      _
    %v45 = vld [vmem:[#allocation3] sm:$0xff]
    %v46 = vld [vmem:[#allocation3 + $0x8] sm:$0xff]
    %v47 = vld [vmem:[#allocation3 + $0x10] sm:$0xff]
    %v48 = vld [vmem:[#allocation3 + $0x18] sm:$0xff]
    %v49 = vld [vmem:[#allocation3 + $0x20] sm:$0xff]
    %v50 = vld [vmem:[#allocation3 + $0x28] sm:$0xff]
    %v51 = vld [vmem:[#allocation3 + $0x30] sm:$0xff]
    %v52 = vld [vmem:[#allocation3 + $0x38] sm:$0xff]
    %v53 = vld [vmem:[%s1] sm:$0x1]
    %v54 = vld [vmem:[%s1 + $0x1] sm:$0x1]
    %v55 = vld [vmem:[%s1 + $0x2] sm:$0x1]
    %v56 = vld [vmem:[%s1 + $0x3] sm:$0x1]
    %v57 = vld [vmem:[%s1 + $0x4] sm:$0x1]
    %v58 = vld [vmem:[%s1 + $0x5] sm:$0x1]
    %v59 = vld [vmem:[%s1 + $0x6] sm:$0x1]
    %v60 = vld [vmem:[%s1 + $0x7] sm:$0x1]
    %v61 = vld [vmem:[%s2] sm:$0x1]
    %s62 = sld [smem:[#allocation2]]
    %v63 = vlaneseq
    %v64 = vshrl.u32 %v63, 7
    %s65 = smul.u32 0, 8
    %v66 = vstv %s65
    %v67 = vadd.s32 %v64, %v66
    %v68 = vperm.slane %v53, 0
    %v69 = vperm.slane %v54, 0
    %v70 = vperm.slane %v55, 0
    %v71 = vperm.slane %v56, 0
    %v72 = vperm.slane %v57, 0
    %v73 = vperm.slane %v58, 0
    %v74 = vperm.slane %v59, 0
    %v75 = vperm.slane %v60, 0
    %vm76 = vcmp.lt.s32.totalorder %v67, %v68
    %vm77 = vcmp.lt.s32.totalorder %v67, %v69
    %vm78 = vcmp.lt.s32.totalorder %v67, %v70
    %vm79 = vcmp.lt.s32.totalorder %v67, %v71
    %vm80 = vcmp.lt.s32.totalorder %v67, %v72
    %vm81 = vcmp.lt.s32.totalorder %v67, %v73
    %vm82 = vcmp.lt.s32.totalorder %v67, %v74
    %vm83 = vcmp.lt.s32.totalorder %v67, %v75
    %v85 = vperm.slane %v61, 0
    %v87 = vmul.f32 %v45, %v85
    %v88 = vmul.f32 %v46, %v85
    %v89 = vmul.f32 %v47, %v85
    %v90 = vmul.f32 %v48, %v85
    %v91 = vmul.f32 %v49, %v85
    %v92 = vmul.f32 %v50, %v85
    %v93 = vmul.f32 %v51, %v85
    %v94 = vmul.f32 %v52, %v85
    %vm95 = vcmask 261120
    %v96 = vsel %vm95, %v87, 0.0
    %97 = vadd.xlane.f32.xlu0 %v96
    %v98 = vpop.xlane.xlu0 %97
    %v99 = vsel %vm95, %v88, 0.0
    %100 = vadd.xlane.f32.xlu0 %v99
    %v101 = vpop.xlane.xlu0 %100
    %v102 = vsel %vm95, %v89, 0.0
    %103 = vadd.xlane.f32.xlu0 %v102
    %v104 = vpop.xlane.xlu0 %103
    %v105 = vsel %vm95, %v90, 0.0
    %106 = vadd.xlane.f32.xlu0 %v105
    %v107 = vpop.xlane.xlu0 %106
    %v108 = vsel %vm95, %v91, 0.0
    %109 = vadd.xlane.f32.xlu0 %v108
    %v110 = vpop.xlane.xlu0 %109
    %v111 = vsel %vm95, %v92, 0.0
    %112 = vadd.xlane.f32.xlu0 %v111
    %v113 = vpop.xlane.xlu0 %112
    %v114 = vsel %vm95, %v93, 0.0
    %115 = vadd.xlane.f32.xlu0 %v114
    %v116 = vpop.xlane.xlu0 %115
    %v117 = vsel %vm95, %v94, 0.0
    %118 = vadd.xlane.f32.xlu0 %v117
    %v119 = vpop.xlane.xlu0 %118
    %v120 = vstv %s62
    %v121 = vadd.f32 %v98, %v120
    %v122 = vadd.f32 %v101, %v120
    %v123 = vadd.f32 %v104, %v120
    %v124 = vadd.f32 %v107, %v120
    %v125 = vadd.f32 %v110, %v120
    %v126 = vadd.f32 %v113, %v120
    %v127 = vadd.f32 %v116, %v120
    %v128 = vadd.f32 %v119, %v120
    %v129 = vxor.u32 %v121, 2147483648
    %v130 = vxor.u32 %v122, 2147483648
    %v131 = vxor.u32 %v123, 2147483648
    %v132 = vxor.u32 %v124, 2147483648
    %v133 = vxor.u32 %v125, 2147483648
    %v134 = vxor.u32 %v126, 2147483648
    %v135 = vxor.u32 %v127, 2147483648
    %v136 = vxor.u32 %v128, 2147483648
    %v137 = vmul.f32 %v129, 1.442695
    %v138 = vpow.pop %v137
    %v139 = vmul.f32 %v130, 1.442695
    %v140 = vpow.pop %v139
    %v141 = vmul.f32 %v131, 1.442695
    %v142 = vpow.pop %v141
    %v143 = vmul.f32 %v132, 1.442695
    %v144 = vpow.pop %v143
    %v145 = vmul.f32 %v133, 1.442695
    %v146 = vpow.pop %v145
    %v147 = vmul.f32 %v134, 1.442695
    %v148 = vpow.pop %v147
    %v149 = vmul.f32 %v135, 1.442695
    %v150 = vpow.pop %v149
    %v151 = vmul.f32 %v136, 1.442695
    %v152 = vpow.pop %v151
    %v153 = vadd.f32 %v138, 1.0
    %v154 = vadd.f32 %v140, 1.0
    %v155 = vadd.f32 %v142, 1.0
    %v156 = vadd.f32 %v144, 1.0
    %v157 = vadd.f32 %v146, 1.0
    %v158 = vadd.f32 %v148, 1.0
    %v159 = vadd.f32 %v150, 1.0
    %v160 = vadd.f32 %v152, 1.0
    %v161 = vrcp.pop %v153
    %v162 = vmul.f32 %v153, %v161
    %v163 = vsub.f32 1.0, %v162
    %v164 = vmul.f32 %v161, %v163
    %v165 = vadd.f32 %v161, %v164
    %vm166 = vweird.f32 %v153
    %vm167 = vweird.f32 %v161
    %vm168 = vmor %vm166, %vm167
    %v169 = vsel %vm168, %v161, %v165
    %v170 = vand.u32 2147483647, %v153
    %vm171 = vcmp.eq.f32.partialorder %v170, 8.507059e+37
    %v172 = vand.u32 %v153, 2147483648
    %v173 = vor.u32 1.1754944e-38, %v172
    %v174 = vsel %vm171, %v173, %v169
    %v175 = vmul.f32 1.0, %v174
    %v176 = vrcp.pop %v154
    %v177 = vmul.f32 %v154, %v176
    %v178 = vsub.f32 1.0, %v177
    %v179 = vmul.f32 %v176, %v178
    %v180 = vadd.f32 %v176, %v179
    %vm181 = vweird.f32 %v154
    %vm182 = vweird.f32 %v176
    %vm183 = vmor %vm181, %vm182
    %v184 = vsel %vm183, %v176, %v180
    %v185 = vand.u32 2147483647, %v154
    %vm186 = vcmp.eq.f32.partialorder %v185, 8.507059e+37
    %v187 = vand.u32 %v154, 2147483648
    %v188 = vor.u32 1.1754944e-38, %v187
    %v189 = vsel %vm186, %v188, %v184
    %v190 = vmul.f32 1.0, %v189
    %v191 = vrcp.pop %v155
    %v192 = vmul.f32 %v155, %v191
    %v193 = vsub.f32 1.0, %v192
    %v194 = vmul.f32 %v191, %v193
    %v195 = vadd.f32 %v191, %v194
    %vm196 = vweird.f32 %v155
    %vm197 = vweird.f32 %v191
    %vm198 = vmor %vm196, %vm197
    %v199 = vsel %vm198, %v191, %v195
    %v200 = vand.u32 2147483647, %v155
    %vm201 = vcmp.eq.f32.partialorder %v200, 8.507059e+37
    %v202 = vand.u32 %v155, 2147483648
    %v203 = vor.u32 1.1754944e-38, %v202
    %v204 = vsel %vm201, %v203, %v199
    %v205 = vmul.f32 1.0, %v204
    %v206 = vrcp.pop %v156
    %v207 = vmul.f32 %v156, %v206
    %v208 = vsub.f32 1.0, %v207
    %v209 = vmul.f32 %v206, %v208
    %v210 = vadd.f32 %v206, %v209
    %vm211 = vweird.f32 %v156
    %vm212 = vweird.f32 %v206
    %vm213 = vmor %vm211, %vm212
    %v214 = vsel %vm213, %v206, %v210
    %v215 = vand.u32 2147483647, %v156
    %vm216 = vcmp.eq.f32.partialorder %v215, 8.507059e+37
    %v217 = vand.u32 %v156, 2147483648
    %v218 = vor.u32 1.1754944e-38, %v217
    %v219 = vsel %vm216, %v218, %v214
    %v220 = vmul.f32 1.0, %v219
    %v221 = vrcp.pop %v157
    %v222 = vmul.f32 %v157, %v221
    %v223 = vsub.f32 1.0, %v222
    %v224 = vmul.f32 %v221, %v223
    %v225 = vadd.f32 %v221, %v224
    %vm226 = vweird.f32 %v157
    %vm227 = vweird.f32 %v221
    %vm228 = vmor %vm226, %vm227
    %v229 = vsel %vm228, %v221, %v225
    %v230 = vand.u32 2147483647, %v157
    %vm231 = vcmp.eq.f32.partialorder %v230, 8.507059e+37
    %v232 = vand.u32 %v157, 2147483648
    %v233 = vor.u32 1.1754944e-38, %v232
    %v234 = vsel %vm231, %v233, %v229
    %v235 = vmul.f32 1.0, %v234
    %v236 = vrcp.pop %v158
    %v237 = vmul.f32 %v158, %v236
    %v238 = vsub.f32 1.0, %v237
    %v239 = vmul.f32 %v236, %v238
    %v240 = vadd.f32 %v236, %v239
    %vm241 = vweird.f32 %v158
    %vm242 = vweird.f32 %v236
    %vm243 = vmor %vm241, %vm242
    %v244 = vsel %vm243, %v236, %v240
    %v245 = vand.u32 2147483647, %v158
    %vm246 = vcmp.eq.f32.partialorder %v245, 8.507059e+37
    %v247 = vand.u32 %v158, 2147483648
    %v248 = vor.u32 1.1754944e-38, %v247
    %v249 = vsel %vm246, %v248, %v244
    %v250 = vmul.f32 1.0, %v249
    %v251 = vrcp.pop %v159
    %v252 = vmul.f32 %v159, %v251
    %v253 = vsub.f32 1.0, %v252
    %v254 = vmul.f32 %v251, %v253
    %v255 = vadd.f32 %v251, %v254
    %vm256 = vweird.f32 %v159
    %vm257 = vweird.f32 %v251
    %vm258 = vmor %vm256, %vm257
    %v259 = vsel %vm258, %v251, %v255
    %v260 = vand.u32 2147483647, %v159
    %vm261 = vcmp.eq.f32.partialorder %v260, 8.507059e+37
    %v262 = vand.u32 %v159, 2147483648
    %v263 = vor.u32 1.1754944e-38, %v262
    %v264 = vsel %vm261, %v263, %v259
    %v265 = vmul.f32 1.0, %v264
    %v266 = vrcp.pop %v160
    %v267 = vmul.f32 %v160, %v266
    %v268 = vsub.f32 1.0, %v267
    %v269 = vmul.f32 %v266, %v268
    %v270 = vadd.f32 %v266, %v269
    %vm271 = vweird.f32 %v160
    %vm272 = vweird.f32 %v266
    %vm273 = vmor %vm271, %vm272
    %v274 = vsel %vm273, %v266, %v270
    %v275 = vand.u32 2147483647, %v160
    %vm276 = vcmp.eq.f32.partialorder %v275, 8.507059e+37
    %v277 = vand.u32 %v160, 2147483648
    %v278 = vor.u32 1.1754944e-38, %v277
    %v279 = vsel %vm276, %v278, %v274
    %v280 = vmul.f32 1.0, %v279
    %v281 = vsel %vm76, 1, 0
    %v282 = vsel %vm77, 1, 0
    %v283 = vsel %vm78, 1, 0
    %v284 = vsel %vm79, 1, 0
    %v285 = vsel %vm80, 1, 0
    %v286 = vsel %vm81, 1, 0
    %v287 = vsel %vm82, 1, 0
    %v288 = vsel %vm83, 1, 0
    %v289 = vcvt.s32.f32 %v281
    %v290 = vcvt.s32.f32 %v282
    %v291 = vcvt.s32.f32 %v283
    %v292 = vcvt.s32.f32 %v284
    %v293 = vcvt.s32.f32 %v285
    %v294 = vcvt.s32.f32 %v286
    %v295 = vcvt.s32.f32 %v287
    %v296 = vcvt.s32.f32 %v288
    %v297 = vmul.f32 %v175, %v289
    %v298 = vmul.f32 %v190, %v290
    %v299 = vmul.f32 %v205, %v291
    %v300 = vmul.f32 %v220, %v292
    %v301 = vmul.f32 %v235, %v293
    %v302 = vmul.f32 %v250, %v294
    %v303 = vmul.f32 %v265, %v295
    %v304 = vmul.f32 %v280, %v296
    %v305 = vld [vmem:[#allocation6] sm:$0xff]
    %307 = vset.pattern.permute.xlu0 0
    %308 = vperm.xlu0 %307, %v297
    %v309 = vpop.permute.xlu0 %308
    %312 = vset.pattern.permute.xlu0 0
    %313 = vperm.xlu0 %312, %v298
    %v314 = vpop.permute.xlu0 %313
    %317 = vset.pattern.permute.xlu0 0
    %318 = vperm.xlu0 %317, %v299
    %v319 = vpop.permute.xlu0 %318
    %322 = vset.pattern.permute.xlu0 0
    %323 = vperm.xlu0 %322, %v300
    %v324 = vpop.permute.xlu0 %323
    %327 = vset.pattern.permute.xlu0 0
    %328 = vperm.xlu0 %327, %v301
    %v329 = vpop.permute.xlu0 %328
    %332 = vset.pattern.permute.xlu0 0
    %333 = vperm.xlu0 %332, %v302
    %v334 = vpop.permute.xlu0 %333
    %337 = vset.pattern.permute.xlu0 0
    %338 = vperm.xlu0 %337, %v303
    %v339 = vpop.permute.xlu0 %338
    %342 = vset.pattern.permute.xlu0 0
    %343 = vperm.xlu0 %342, %v304
    %v344 = vpop.permute.xlu0 %343
    %v346 = vmul.f32 %v45, %v309
    %v347 = vmul.f32 %v46, %v314
    %v348 = vmul.f32 %v47, %v319
    %v349 = vmul.f32 %v48, %v324
    %v350 = vmul.f32 %v49, %v329
    %v351 = vmul.f32 %v50, %v334
    %v352 = vmul.f32 %v51, %v339
    %v353 = vmul.f32 %v52, %v344
    %v354 = vsel %vm95, %v346, 0.0
    %v355 = vrot.slane %v354, 4
    %v356 = vadd.f32 %v354, %v355
    %v357 = vrot.slane %v356, 2
    %v358 = vadd.f32 %v356, %v357
    %v359 = vrot.slane %v358, 1
    %v360 = vadd.f32 %v358, %v359
    %v361 = vsel %vm95, %v347, 0.0
    %v362 = vrot.slane %v361, 4
    %v363 = vadd.f32 %v361, %v362
    %v364 = vrot.slane %v363, 2
    %v365 = vadd.f32 %v363, %v364
    %v366 = vrot.slane %v365, 1
    %v367 = vadd.f32 %v365, %v366
    %v368 = vsel %vm95, %v348, 0.0
    %v369 = vrot.slane %v368, 4
    %v370 = vadd.f32 %v368, %v369
    %v371 = vrot.slane %v370, 2
    %v372 = vadd.f32 %v370, %v371
    %v373 = vrot.slane %v372, 1
    %v374 = vadd.f32 %v372, %v373
    %v375 = vsel %vm95, %v349, 0.0
    %v376 = vrot.slane %v375, 4
    %v377 = vadd.f32 %v375, %v376
    %v378 = vrot.slane %v377, 2
    %v379 = vadd.f32 %v377, %v378
    %v380 = vrot.slane %v379, 1
    %v381 = vadd.f32 %v379, %v380
    %v382 = vsel %vm95, %v350, 0.0
    %v383 = vrot.slane %v382, 4
    %v384 = vadd.f32 %v382, %v383
    %v385 = vrot.slane %v384, 2
    %v386 = vadd.f32 %v384, %v385
    %v387 = vrot.slane %v386, 1
    %v388 = vadd.f32 %v386, %v387
    %v389 = vsel %vm95, %v351, 0.0
    %v390 = vrot.slane %v389, 4
    %v391 = vadd.f32 %v389, %v390
    %v392 = vrot.slane %v391, 2
    %v393 = vadd.f32 %v391, %v392
    %v394 = vrot.slane %v393, 1
    %v395 = vadd.f32 %v393, %v394
    %v396 = vsel %vm95, %v352, 0.0
    %v397 = vrot.slane %v396, 4
    %v398 = vadd.f32 %v396, %v397
    %v399 = vrot.slane %v398, 2
    %v400 = vadd.f32 %v398, %v399
    %v401 = vrot.slane %v400, 1
    %v402 = vadd.f32 %v400, %v401
    %v403 = vsel %vm95, %v353, 0.0
    %v404 = vrot.slane %v403, 4
    %v405 = vadd.f32 %v403, %v404
    %v406 = vrot.slane %v405, 2
    %v407 = vadd.f32 %v405, %v406
    %v408 = vrot.slane %v407, 1
    %v409 = vadd.f32 %v407, %v408
    %vm418 = vcmask 1041409
    %v419 = vsel %vm418, %v367, %v360
    %vm420 = vcmask 1042434
    %v421 = vsel %vm420, %v374, %v419
    %vm422 = vcmask 1043459
    %v423 = vsel %vm422, %v381, %v421
    %vm424 = vcmask 1044484
    %v425 = vsel %vm424, %v388, %v423
    %vm426 = vcmask 1045509
    %v427 = vsel %vm426, %v395, %v425
    %vm428 = vcmask 1046534
    %v429 = vsel %vm428, %v402, %v427
    %vm430 = vcmask 1047559
    %v431 = vsel %vm430, %v409, %v429
    %v433 = vadd.f32 %v305, %v431
    %434 = vst.msk [vmem:[#allocation6] sm:$0xff] %vm95, %v433
    %v435 = vld [vmem:[#allocation7] sm:$0xff]
    %436 = vset.pattern.permute.xlu0 0
    %437 = vperm.xlu0 %436, %v281
    %v438 = vpop.permute.xlu0 %437
    %439 = vset.pattern.permute.xlu0 0
    %440 = vperm.xlu0 %439, %v282
    %v441 = vpop.permute.xlu0 %440
    %442 = vset.pattern.permute.xlu0 0
    %443 = vperm.xlu0 %442, %v283
    %v444 = vpop.permute.xlu0 %443
    %445 = vset.pattern.permute.xlu0 0
    %446 = vperm.xlu0 %445, %v284
    %v447 = vpop.permute.xlu0 %446
    %448 = vset.pattern.permute.xlu0 0
    %449 = vperm.xlu0 %448, %v285
    %v450 = vpop.permute.xlu0 %449
    %451 = vset.pattern.permute.xlu0 0
    %452 = vperm.xlu0 %451, %v286
    %v453 = vpop.permute.xlu0 %452
    %454 = vset.pattern.permute.xlu0 0
    %455 = vperm.xlu0 %454, %v287
    %v456 = vpop.permute.xlu0 %455
    %457 = vset.pattern.permute.xlu0 0
    %458 = vperm.xlu0 %457, %v288
    %v459 = vpop.permute.xlu0 %458
    %vm460 = vcmp.eq.s32.totalorder %v438, 1
    %vm461 = vcmp.eq.s32.totalorder %v441, 1
    %vm462 = vcmp.eq.s32.totalorder %v444, 1
    %vm463 = vcmp.eq.s32.totalorder %v447, 1
    %vm464 = vcmp.eq.s32.totalorder %v450, 1
    %vm465 = vcmp.eq.s32.totalorder %v453, 1
    %vm466 = vcmp.eq.s32.totalorder %v456, 1
    %vm467 = vcmp.eq.s32.totalorder %v459, 1
    %v468 = vsel %vm460, %v45, -1e+30
    %v469 = vsel %vm461, %v46, -1e+30
    %v470 = vsel %vm462, %v47, -1e+30
    %v471 = vsel %vm463, %v48, -1e+30
    %v472 = vsel %vm464, %v49, -1e+30
    %v473 = vsel %vm465, %v50, -1e+30
    %v474 = vsel %vm466, %v51, -1e+30
    %v475 = vsel %vm467, %v52, -1e+30
    %v476 = vsel %vm95, %v468, -inf
    %v477 = vrot.slane %v476, 4
    %v478 = vmax.f32 %v476, %v477
    %v479 = vrot.slane %v478, 2
    %v480 = vmax.f32 %v478, %v479
    %v481 = vrot.slane %v480, 1
    %v482 = vmax.f32 %v480, %v481
    %v483 = vsel %vm95, %v469, -inf
    %v484 = vrot.slane %v483, 4
    %v485 = vmax.f32 %v483, %v484
    %v486 = vrot.slane %v485, 2
    %v487 = vmax.f32 %v485, %v486
    %v488 = vrot.slane %v487, 1
    %v489 = vmax.f32 %v487, %v488
    %v490 = vsel %vm95, %v470, -inf
    %v491 = vrot.slane %v490, 4
    %v492 = vmax.f32 %v490, %v491
    %v493 = vrot.slane %v492, 2
    %v494 = vmax.f32 %v492, %v493
    %v495 = vrot.slane %v494, 1
    %v496 = vmax.f32 %v494, %v495
    %v497 = vsel %vm95, %v471, -inf
    %v498 = vrot.slane %v497, 4
    %v499 = vmax.f32 %v497, %v498
    %v500 = vrot.slane %v499, 2
    %v501 = vmax.f32 %v499, %v500
    %v502 = vrot.slane %v501, 1
    %v503 = vmax.f32 %v501, %v502
    %v504 = vsel %vm95, %v472, -inf
    %v505 = vrot.slane %v504, 4
    %v506 = vmax.f32 %v504, %v505
    %v507 = vrot.slane %v506, 2
    %v508 = vmax.f32 %v506, %v507
    %v509 = vrot.slane %v508, 1
    %v510 = vmax.f32 %v508, %v509
    %v511 = vsel %vm95, %v473, -inf
    %v512 = vrot.slane %v511, 4
    %v513 = vmax.f32 %v511, %v512
    %v514 = vrot.slane %v513, 2
    %v515 = vmax.f32 %v513, %v514
    %v516 = vrot.slane %v515, 1
    %v517 = vmax.f32 %v515, %v516
    %v518 = vsel %vm95, %v474, -inf
    %v519 = vrot.slane %v518, 4
    %v520 = vmax.f32 %v518, %v519
    %v521 = vrot.slane %v520, 2
    %v522 = vmax.f32 %v520, %v521
    %v523 = vrot.slane %v522, 1
    %v524 = vmax.f32 %v522, %v523
    %v525 = vsel %vm95, %v475, -inf
    %v526 = vrot.slane %v525, 4
    %v527 = vmax.f32 %v525, %v526
    %v528 = vrot.slane %v527, 2
    %v529 = vmax.f32 %v527, %v528
    %v530 = vrot.slane %v529, 1
    %v531 = vmax.f32 %v529, %v530
    %v540 = vsel %vm418, %v489, %v482
    %v541 = vsel %vm420, %v496, %v540
    %v542 = vsel %vm422, %v503, %v541
    %v543 = vsel %vm424, %v510, %v542
    %v544 = vsel %vm426, %v517, %v543
    %v545 = vsel %vm428, %v524, %v544
    %v546 = vsel %vm430, %v531, %v545
    %v548 = vmax.f32 %v435, %v546
    %549 = vst.msk [vmem:[#allocation7] sm:$0xff] %vm95, %v548
    // Predicated region
    $region26: #{tpu_custom_call.1} parent=1 // pred_check
      _
    $region27: #{tpu_custom_call.1} parent=1 // pred_check_branch
      %551 = sbr.rel (0) target = $region29
    $region28: #{tpu_custom_call.1} parent=1 // pred_region
      %553 = vsyncadd [#allocation5], 0
      %s555 = sshll.u32 [#allocation6], 4
      %s556 = int_to_ptr.vmem [resolvable:$true] %s555
      %s557 = sshll.u32 %s4, 4
      %s558 = int_to_ptr.hbm [resolvable:$true] %s557
      %560 = dma.vmem_to_hbm [thread:$0]  %s556, 128, %s558, [#allocation5]
    $region29: #{tpu_custom_call.1} parent=1 // pred_fallthru
      _
    // Predicated region
    $region30: #{tpu_custom_call.1} parent=1 // pred_check
      _
    $region31: #{tpu_custom_call.1} parent=1 // pred_check_branch
      %562 = sbr.rel (0) target = $region33
    $region32: #{tpu_custom_call.1} parent=1 // pred_region
      %564 = vsyncadd [#allocation8], 0
      %s566 = sshll.u32 [#allocation7], 4
      %s567 = int_to_ptr.vmem [resolvable:$true] %s566
      %s568 = sshll.u32 %s5, 4
      %s569 = int_to_ptr.hbm [resolvable:$true] %s568
      %571 = dma.vmem_to_hbm [thread:$0]  %s567, 128, %s569, [#allocation8]
    $region33: #{tpu_custom_call.1} parent=1 // pred_fallthru
      _
    // Predicated region
    $region34: #{tpu_custom_call.1} parent=1 // pred_check
      _
    $region35: #{tpu_custom_call.1} parent=1 // pred_check_branch
      %573 = sbr.rel (0) target = $region37
    $region36: #{tpu_custom_call.1} parent=1 // pred_region
      %575 = dma.done [#allocation5], 128
    $region37: #{tpu_custom_call.1} parent=1 // pred_fallthru
      _
    // Predicated region
    $region38: #{tpu_custom_call.1} parent=1 // pred_check
      _
    $region39: #{tpu_custom_call.1} parent=1 // pred_check_branch
      %577 = sbr.rel (0) target = $region41
    $region40: #{tpu_custom_call.1} parent=1 // pred_region
      %579 = dma.done [#allocation8], 128
    $region41: #{tpu_custom_call.1} parent=1 // pred_fallthru
      _
    %580 = vsyncpa [#allocation4], 1
    %581 = vsyncpa [#allocation5], 1
    %582 = vsyncpa [#allocation8], 1

</llo_original>
